<compile_context>
chip_gen: v6e
topology: v6e:2x2x1
jax: 0.10.0
libtpu: 0.0.40
codegen_flags: <defaults>
</compile_context>

<pallas_src>
import functools

import jax
import jax.numpy as jnp
from jax.experimental import pallas as pl
from jax.experimental.pallas import tpu as pltpu


_LANE = 128          # pad feature dims to multiples of the 128-lane vreg width
_SUBLANE = 8         # sublane packing granularity for the batch tile
_MIN_GRID_STEPS = 4  # keep >= 4 grid steps (v7x megacore + DMA overlap)


def _round_up(x, m):
    return (x + m - 1) // m * m


def _make_mlp_kernel(n_linear: int):
    """Fused MLP kernel. Ref order: x, (w0, b0), ..., (w_{L-1}, b_{L-1}), out."""

    def kernel(*refs):
        x_ref = refs[0]
        param_refs = refs[1:1 + 2 * n_linear]
        o_ref = refs[1 + 2 * n_linear]

        h = x_ref[...]                           # (TM, K0) bf16 activations
        for i in range(n_linear):
            w = param_refs[2 * i][...]           # (K_i, N_i) bf16, resident
            b = param_refs[2 * i + 1][...]       # (1, N_i) f32 -> broadcasts
            # bf16 MXU matmul, f32 accumulation; bias/ReLU epilogue in f32
            # (v5e-friendly). Layer-0 cast is a no-op (h already bf16).
            h = jnp.dot(h.astype(w.dtype), w,
                        preferred_element_type=jnp.float32) + b
            if i < n_linear - 1:
                h = jnp.maximum(h, 0.0)          # ReLU; Dropout(p=0.0) == identity
        o_ref[...] = h.astype(o_ref.dtype)       # bf16 lane-dense store

    return kernel


def init_params(key, input_dim, hidden_dims, output_dim,
                w_dtype=jnp.bfloat16, b_dtype=jnp.float32):
    """PyTorch-default-style init (uniform +/- 1/sqrt(fan_in)); W stored (in, out)."""
    dims = [input_dim] + list(hidden_dims) + [output_dim]
    params = []
    for i in range(len(dims) - 1):
        fan_in, fan_out = dims[i], dims[i + 1]
        key, kw, kb = jax.random.split(key, 3)
        bound = 1.0 / (fan_in ** 0.5)
        w = jax.random.uniform(kw, (fan_in, fan_out), jnp.float32, -bound, bound)
        b = jax.random.uniform(kb, (1, fan_out), jnp.float32, -bound, bound)
        params.append((w.astype(w_dtype), b.astype(b_dtype)))
    return params


def _make_in_specs(tm_eff, k0_p, padded_params, single_buffer_weights):
    """x is batch-tiled; weights/biases have a constant index_map (resident)."""
    specs = [pl.BlockSpec((tm_eff, k0_p), lambda i: (i, 0))]
    for (w_p, b_p) in padded_params:
        if single_buffer_weights:
            specs.append(pl.BlockSpec(w_p.shape, lambda i: (0, 0),
                                      pipeline_mode=pl.Buffered(1)))
            specs.append(pl.BlockSpec(b_p.shape, lambda i: (0, 0),
                                      pipeline_mode=pl.Buffered(1)))
        else:
            specs.append(pl.BlockSpec(w_p.shape, lambda i: (0, 0)))
            specs.append(pl.BlockSpec(b_p.shape, lambda i: (0, 0)))
    return specs


@functools.partial(jax.jit,
                   static_argnames=("output_dim", "tm", "single_buffer_weights"))
def net_forward(x_nchw, params, output_dim, tm=512, single_buffer_weights=True):
    """Forward pass of Net. x_nchw: (N, C, H, W)."""
    n = x_nchw.shape[0]
    # nn.Flatten(); bf16 input stream (matches the bf16-at-dot reference path).
    x = x_nchw.reshape(n, -1).astype(jnp.bfloat16)
    k0 = x.shape[1]
    n_linear = len(params)

    # --- zero-pad every feature dim to a multiple of 128 (lane-dense, exact) ---
    k0_p = _round_up(k0, _LANE)
    padded_params = []
    in_p = k0_p
    for (w, b) in params:
        kin, kout = w.shape
        kout_p = _round_up(kout, _LANE)
        w_p = jnp.zeros((in_p, kout_p), w.dtype).at[:kin, :kout].set(w)
        b_p = jnp.zeros((1, kout_p), b.dtype).at[:, :kout].set(b)
        padded_params.append((w_p, b_p))
        in_p = kout_p
    out_p = in_p

    if k0_p != k0:
        x = jnp.pad(x, ((0, 0), (0, k0_p - k0)))

    # --- batch tiling: large tiles (default 512), but keep >= 4 grid steps ---
    tm_cap = _round_up(max(1, pl.cdiv(n, _MIN_GRID_STEPS)), _SUBLANE)
    tm_eff = max(_SUBLANE, min(tm, tm_cap))
    n_p = _round_up(n, tm_eff)
    if n_p != n:
        x = jnp.pad(x, ((0, n_p - n), (0, 0)))
    grid = (n_p // tm_eff,)

    in_specs = _make_in_specs(tm_eff, k0_p, padded_params, single_buffer_weights)
    out_specs = pl.BlockSpec((tm_eff, out_p), lambda i: (i, 0))
    flat_params = [p for wb in padded_params for p in wb]

    # --- VMEM budget derived from the actual tile / resident sizes ---
    weight_bufs = 1 if single_buffer_weights else 2
    resident_bytes = weight_bufs * sum(
        w.size * w.dtype.itemsize + b.size * b.dtype.itemsize
        for w, b in padded_params)
    x_tile_bytes = tm_eff * k0_p * x.dtype.itemsize          # bf16
    out_tile_bytes = tm_eff * out_p * 2                      # bf16
    max_feat_p = max([k0_p] + [w.shape[1] for w, _ in padded_params])
    act_scratch = 2 * tm_eff * max_feat_p * 4                # f32 intermediates
    vmem_limit_bytes = int(min(64 << 20,                     # <= v7x physical VMEM
                               max(8 << 20,
                                   2 * (x_tile_bytes + out_tile_bytes)
                                   + resident_bytes + act_scratch + (2 << 20))))

    flops = 2 * n_p * sum(int(w.shape[0]) * int(w.shape[1])
                          for w, _ in padded_params)
    bytes_accessed = (x.size * x.dtype.itemsize
                      + sum(w.size * w.dtype.itemsize + b.size * b.dtype.itemsize
                            for w, b in padded_params)
                      + n_p * out_p * 2)

    out = pl.pallas_call(
        _make_mlp_kernel(n_linear),
        out_shape=jax.ShapeDtypeStruct((n_p, out_p), jnp.bfloat16),
        grid=grid,
        in_specs=in_specs,
        out_specs=out_specs,
        compiler_params=pltpu.CompilerParams(
            dimension_semantics=("parallel",),   # shard batch tiles across TCs
            vmem_limit_bytes=vmem_limit_bytes,
        ),
        cost_estimate=pl.CostEstimate(flops=flops, transcendentals=0,
                                      bytes_accessed=bytes_accessed),
    )(x, *flat_params)

    # Slice away batch / feature padding; upcast the bf16 slab to f32.
    return out[:n, :output_dim].astype(jnp.float32)


if __name__ == "__main__":
    # Small shapes consistent with the module's forward: x (N, C, H, W) flattened.
    batch, C, H, W = 8, 4, 8, 8
    input_dim = C * H * W              # 256
    hidden_dims = [64, 32]
    output_dim = 16

    key = jax.random.PRNGKey(0)
    key, kx = jax.random.split(key)
    x = jax.random.normal(kx, (batch, C, H, W), dtype=jnp.float32)

    params = init_params(key, input_dim, hidden_dims, output_dim)

    try:
        out = net_forward(x, params, output_dim)
        out = jax.block_until_ready(out)
    except Exception:
        # Fallback if this JAX build rejects pipeline_mode=pl.Buffered(1)
        # on the resident weight/bias BlockSpecs.
        out = net_forward(x, params, output_dim, single_buffer_weights=False)
        out = jax.block_until_ready(out)

    # Pure-JAX reference with the same precision path:
    # bf16 x / weights at the dot, f32 accumulation + bias/ReLU, bf16 final store.
    h = x.reshape(batch, -1).astype(jnp.bfloat16)
    for i, (w, b) in enumerate(params):
        h = jnp.dot(h.astype(w.dtype), w, preferred_element_type=jnp.float32) + b
        if i < len(params) - 1:
            h = jnp.maximum(h, 0.0)
    ref = h.astype(jnp.bfloat16).astype(jnp.float32)

    assert out.shape == (batch, output_dim)
    assert jnp.allclose(out, ref, atol=1e-2, rtol=1e-2), \
        float(jnp.max(jnp.abs(out - ref)))

    print("KERNEL_OK")
</pallas_src>

<mosaic_0001>
module attributes {stable_mosaic.version = 11 : i64} {
  func.func @kernel(%arg0: i32, %arg1: memref<8x256xbf16, #tpu.memory_space<vmem>>, %arg2: memref<256x128xbf16, #tpu.memory_space<vmem>>, %arg3: memref<1x128xf32, #tpu.memory_space<vmem>>, %arg4: memref<128x128xbf16, #tpu.memory_space<vmem>>, %arg5: memref<1x128xf32, #tpu.memory_space<vmem>>, %arg6: memref<128x128xbf16, #tpu.memory_space<vmem>>, %arg7: memref<1x128xf32, #tpu.memory_space<vmem>>, %arg8: memref<8x128xbf16, #tpu.memory_space<vmem>>) attributes {dimension_semantics = [#tpu.dimension_semantics<parallel>], iteration_bounds = array<i64: 1>, scalar_prefetch = 0 : i64, scratch_operands = 0 : i64, tpu.core_type = #tpu.core_type<tc>, window_params = [{transform_indices = @transform_0, window_bounds = array<i64: 8, 256>}, {pipeline_mode = #tpu.pipeline_mode<synchronous>, transform_indices = @transform_1, window_bounds = array<i64: 256, 128>}, {pipeline_mode = #tpu.pipeline_mode<synchronous>, transform_indices = @transform_2, window_bounds = array<i64: 1, 128>}, {pipeline_mode = #tpu.pipeline_mode<synchronous>, transform_indices = @transform_3, window_bounds = array<i64: 128, 128>}, {pipeline_mode = #tpu.pipeline_mode<synchronous>, transform_indices = @transform_4, window_bounds = array<i64: 1, 128>}, {pipeline_mode = #tpu.pipeline_mode<synchronous>, transform_indices = @transform_5, window_bounds = array<i64: 128, 128>}, {pipeline_mode = #tpu.pipeline_mode<synchronous>, transform_indices = @transform_6, window_bounds = array<i64: 1, 128>}, {transform_indices = @transform_7, window_bounds = array<i64: 8, 128>}]} {
    %c0 = arith.constant 0 : index
    %c0_0 = arith.constant 0 : index
    %0 = vector.load %arg1[%c0, %c0_0] : memref<8x256xbf16, #tpu.memory_space<vmem>>, vector<8x256xbf16>
    %c0_1 = arith.constant 0 : index
    %c0_2 = arith.constant 0 : index
    %1 = vector.load %arg2[%c0_1, %c0_2] : memref<256x128xbf16, #tpu.memory_space<vmem>>, vector<256x128xbf16>
    %c0_3 = arith.constant 0 : index
    %c0_4 = arith.constant 0 : index
    %2 = vector.load %arg3[%c0_3, %c0_4] : memref<1x128xf32, #tpu.memory_space<vmem>>, vector<1x128xf32>
    %cst = arith.constant dense<0.000000e+00> : vector<8x128xf32>
    %3 = tpu.matmul %0, %1, %cst {dimension_numbers = #tpu.dot_dimension_numbers<[1], [0], [0], [1], [0, 0, 1, 1], [], []>} : vector<8x256xbf16>, vector<256x128xbf16>, vector<8x128xf32> -> vector<8x128xf32>
    %4 = vector.broadcast %2 : vector<1x128xf32> to vector<8x128xf32>
    %5 = arith.addf %3, %4 : vector<8x128xf32>
    %cst_5 = arith.constant 0.000000e+00 : f32
    %6 = vector.broadcast %cst_5 : f32 to vector<8x128xf32>
    %7 = arith.maximumf %5, %6 : vector<8x128xf32>
    %c0_6 = arith.constant 0 : index
    %c0_7 = arith.constant 0 : index
    %8 = vector.load %arg4[%c0_6, %c0_7] : memref<128x128xbf16, #tpu.memory_space<vmem>>, vector<128x128xbf16>
    %c0_8 = arith.constant 0 : index
    %c0_9 = arith.constant 0 : index
    %9 = vector.load %arg5[%c0_8, %c0_9] : memref<1x128xf32, #tpu.memory_space<vmem>>, vector<1x128xf32>
    %10 = arith.truncf %7 : vector<8x128xf32> to vector<8x128xbf16>
    %cst_10 = arith.constant dense<0.000000e+00> : vector<8x128xf32>
    %11 = tpu.matmul %10, %8, %cst_10 {dimension_numbers = #tpu.dot_dimension_numbers<[1], [0], [0], [1], [0, 0, 1, 1], [], []>} : vector<8x128xbf16>, vector<128x128xbf16>, vector<8x128xf32> -> vector<8x128xf32>
    %12 = vector.broadcast %9 : vector<1x128xf32> to vector<8x128xf32>
    %13 = arith.addf %11, %12 : vector<8x128xf32>
    %cst_11 = arith.constant 0.000000e+00 : f32
    %14 = vector.broadcast %cst_11 : f32 to vector<8x128xf32>
    %15 = arith.maximumf %13, %14 : vector<8x128xf32>
    %c0_12 = arith.constant 0 : index
    %c0_13 = arith.constant 0 : index
    %16 = vector.load %arg6[%c0_12, %c0_13] : memref<128x128xbf16, #tpu.memory_space<vmem>>, vector<128x128xbf16>
    %c0_14 = arith.constant 0 : index
    %c0_15 = arith.constant 0 : index
    %17 = vector.load %arg7[%c0_14, %c0_15] : memref<1x128xf32, #tpu.memory_space<vmem>>, vector<1x128xf32>
    %18 = arith.truncf %15 : vector<8x128xf32> to vector<8x128xbf16>
    %cst_16 = arith.constant dense<0.000000e+00> : vector<8x128xf32>
    %19 = tpu.matmul %18, %16, %cst_16 {dimension_numbers = #tpu.dot_dimension_numbers<[1], [0], [0], [1], [0, 0, 1, 1], [], []>} : vector<8x128xbf16>, vector<128x128xbf16>, vector<8x128xf32> -> vector<8x128xf32>
    %20 = vector.broadcast %17 : vector<1x128xf32> to vector<8x128xf32>
    %21 = arith.addf %19, %20 : vector<8x128xf32>
    %22 = arith.truncf %21 : vector<8x128xf32> to vector<8x128xbf16>
    %c0_17 = arith.constant 0 : index
    %c0_18 = arith.constant 0 : index
    %23 = vector.load %arg8[%c0_17, %c0_18] : memref<8x128xbf16, #tpu.memory_space<vmem>>, vector<8x128xbf16>
    tpu.vector_store %arg8[%c0_17, %c0_18], %22 {strides = array<i32>} : memref<8x128xbf16, #tpu.memory_space<vmem>>, vector<8x128xbf16>,
    return
  }
  func.func @transform_0(%arg0: i32) -> (i32, i32) {
    %c0_i32 = arith.constant 0 : i32
    %c0_i32_0 = arith.constant 0 : i32
    return %arg0, %c0_i32 : i32, i32
  }
  func.func @transform_1(%arg0: i32) -> (i32, i32) {
    %c0_i32 = arith.constant 0 : i32
    %c0_i32_0 = arith.constant 0 : i32
    %c0_i32_1 = arith.constant 0 : i32
    return %c0_i32, %c0_i32_0 : i32, i32
  }
  func.func @transform_2(%arg0: i32) -> (i32, i32) {
    %c0_i32 = arith.constant 0 : i32
    %c0_i32_0 = arith.constant 0 : i32
    %c0_i32_1 = arith.constant 0 : i32
    return %c0_i32, %c0_i32_0 : i32, i32
  }
  func.func @transform_3(%arg0: i32) -> (i32, i32) {
    %c0_i32 = arith.constant 0 : i32
    %c0_i32_0 = arith.constant 0 : i32
    %c0_i32_1 = arith.constant 0 : i32
    return %c0_i32, %c0_i32_0 : i32, i32
  }
  func.func @transform_4(%arg0: i32) -> (i32, i32) {
    %c0_i32 = arith.constant 0 : i32
    %c0_i32_0 = arith.constant 0 : i32
    %c0_i32_1 = arith.constant 0 : i32
    return %c0_i32, %c0_i32_0 : i32, i32
  }
  func.func @transform_5(%arg0: i32) -> (i32, i32) {
    %c0_i32 = arith.constant 0 : i32
    %c0_i32_0 = arith.constant 0 : i32
    %c0_i32_1 = arith.constant 0 : i32
    return %c0_i32, %c0_i32_0 : i32, i32
  }
  func.func @transform_6(%arg0: i32) -> (i32, i32) {
    %c0_i32 = arith.constant 0 : i32
    %c0_i32_0 = arith.constant 0 : i32
    %c0_i32_1 = arith.constant 0 : i32
    return %c0_i32, %c0_i32_0 : i32, i32
  }
  func.func @transform_7(%arg0: i32) -> (i32, i32) {
    %c0_i32 = arith.constant 0 : i32
    %c0_i32_0 = arith.constant 0 : i32
    return %arg0, %c0_i32 : i32, i32
  }
}

module attributes {stable_mosaic.version = 11 : i64} {
  func.func @kernel(%arg0: i32, %arg1: memref<8x256xbf16, #tpu.memory_space<vmem>>, %arg2: memref<256x128xbf16, #tpu.memory_space<vmem>>, %arg3: memref<1x128xf32, #tpu.memory_space<vmem>>, %arg4: memref<128x128xbf16, #tpu.memory_space<vmem>>, %arg5: memref<1x128xf32, #tpu.memory_space<vmem>>, %arg6: memref<128x128xbf16, #tpu.memory_space<vmem>>, %arg7: memref<1x128xf32, #tpu.memory_space<vmem>>, %arg8: memref<8x128xbf16, #tpu.memory_space<vmem>>) attributes {dimension_semantics = [#tpu.dimension_semantics<parallel>], iteration_bounds = array<i64: 1>, scalar_prefetch = 0 : i64, scratch_operands = 0 : i64, tpu.core_type = #tpu.core_type<tc>, window_params = [{transform_indices = @transform_0, window_bounds = array<i64: 8, 256>}, {pipeline_mode = #tpu.pipeline_mode<synchronous>, transform_indices = @transform_1, window_bounds = array<i64: 256, 128>}, {pipeline_mode = #tpu.pipeline_mode<synchronous>, transform_indices = @transform_2, window_bounds = array<i64: 1, 128>}, {pipeline_mode = #tpu.pipeline_mode<synchronous>, transform_indices = @transform_3, window_bounds = array<i64: 128, 128>}, {pipeline_mode = #tpu.pipeline_mode<synchronous>, transform_indices = @transform_4, window_bounds = array<i64: 1, 128>}, {pipeline_mode = #tpu.pipeline_mode<synchronous>, transform_indices = @transform_5, window_bounds = array<i64: 128, 128>}, {pipeline_mode = #tpu.pipeline_mode<synchronous>, transform_indices = @transform_6, window_bounds = array<i64: 1, 128>}, {transform_indices = @transform_7, window_bounds = array<i64: 8, 128>}]} {
    %c0 = arith.constant 0 : index
    %c0_0 = arith.constant 0 : index
    %0 = vector.load %arg1[%c0, %c0_0] : memref<8x256xbf16, #tpu.memory_space<vmem>>, vector<8x256xbf16>
    %c0_1 = arith.constant 0 : index
    %c0_2 = arith.constant 0 : index
    %1 = vector.load %arg2[%c0_1, %c0_2] : memref<256x128xbf16, #tpu.memory_space<vmem>>, vector<256x128xbf16>
    %c0_3 = arith.constant 0 : index
    %c0_4 = arith.constant 0 : index
    %2 = vector.load %arg3[%c0_3, %c0_4] : memref<1x128xf32, #tpu.memory_space<vmem>>, vector<1x128xf32>
    %cst = arith.constant dense<0.000000e+00> : vector<8x128xf32>
    %3 = tpu.matmul %0, %1, %cst {dimension_numbers = #tpu.dot_dimension_numbers<[1], [0], [0], [1], [0, 0, 1, 1], [], []>} : vector<8x256xbf16>, vector<256x128xbf16>, vector<8x128xf32> -> vector<8x128xf32>
    %4 = vector.broadcast %2 : vector<1x128xf32> to vector<8x128xf32>
    %5 = arith.addf %3, %4 : vector<8x128xf32>
    %cst_5 = arith.constant 0.000000e+00 : f32
    %6 = vector.broadcast %cst_5 : f32 to vector<8x128xf32>
    %7 = arith.maximumf %5, %6 : vector<8x128xf32>
    %c0_6 = arith.constant 0 : index
    %c0_7 = arith.constant 0 : index
    %8 = vector.load %arg4[%c0_6, %c0_7] : memref<128x128xbf16, #tpu.memory_space<vmem>>, vector<128x128xbf16>
    %c0_8 = arith.constant 0 : index
    %c0_9 = arith.constant 0 : index
    %9 = vector.load %arg5[%c0_8, %c0_9] : memref<1x128xf32, #tpu.memory_space<vmem>>, vector<1x128xf32>
    %10 = arith.truncf %7 : vector<8x128xf32> to vector<8x128xbf16>
    %cst_10 = arith.constant dense<0.000000e+00> : vector<8x128xf32>
    %11 = tpu.matmul %10, %8, %cst_10 {dimension_numbers = #tpu.dot_dimension_numbers<[1], [0], [0], [1], [0, 0, 1, 1], [], []>} : vector<8x128xbf16>, vector<128x128xbf16>, vector<8x128xf32> -> vector<8x128xf32>
    %12 = vector.broadcast %9 : vector<1x128xf32> to vector<8x128xf32>
    %13 = arith.addf %11, %12 : vector<8x128xf32>
    %cst_11 = arith.constant 0.000000e+00 : f32
    %14 = vector.broadcast %cst_11 : f32 to vector<8x128xf32>
    %15 = arith.maximumf %13, %14 : vector<8x128xf32>
    %c0_12 = arith.constant 0 : index
    %c0_13 = arith.constant 0 : index
    %16 = vector.load %arg6[%c0_12, %c0_13] : memref<128x128xbf16, #tpu.memory_space<vmem>>, vector<128x128xbf16>
    %c0_14 = arith.constant 0 : index
    %c0_15 = arith.constant 0 : index
    %17 = vector.load %arg7[%c0_14, %c0_15] : memref<1x128xf32, #tpu.memory_space<vmem>>, vector<1x128xf32>
    %18 = arith.truncf %15 : vector<8x128xf32> to vector<8x128xbf16>
    %cst_16 = arith.constant dense<0.000000e+00> : vector<8x128xf32>
    %19 = tpu.matmul %18, %16, %cst_16 {dimension_numbers = #tpu.dot_dimension_numbers<[1], [0], [0], [1], [0, 0, 1, 1], [], []>} : vector<8x128xbf16>, vector<128x128xbf16>, vector<8x128xf32> -> vector<8x128xf32>
    %20 = vector.broadcast %17 : vector<1x128xf32> to vector<8x128xf32>
    %21 = arith.addf %19, %20 : vector<8x128xf32>
    %22 = arith.truncf %21 : vector<8x128xf32> to vector<8x128xbf16>
    %c0_17 = arith.constant 0 : index
    %c0_18 = arith.constant 0 : index
    %23 = vector.load %arg8[%c0_17, %c0_18] : memref<8x128xbf16, #tpu.memory_space<vmem>>, vector<8x128xbf16>
    tpu.vector_store %arg8[%c0_17, %c0_18], %22 {strides = array<i32>} : memref<8x128xbf16, #tpu.memory_space<vmem>>, vector<8x128xbf16>,
    return
  }
  func.func @transform_0(%arg0: i32) -> (i32, i32) {
    %c0_i32 = arith.constant 0 : i32
    %c0_i32_0 = arith.constant 0 : i32
    return %arg0, %c0_i32 : i32, i32
  }
  func.func @transform_1(%arg0: i32) -> (i32, i32) {
    %c0_i32 = arith.constant 0 : i32
    %c0_i32_0 = arith.constant 0 : i32
    %c0_i32_1 = arith.constant 0 : i32
    return %c0_i32, %c0_i32_0 : i32, i32
  }
  func.func @transform_2(%arg0: i32) -> (i32, i32) {
    %c0_i32 = arith.constant 0 : i32
    %c0_i32_0 = arith.constant 0 : i32
    %c0_i32_1 = arith.constant 0 : i32
    return %c0_i32, %c0_i32_0 : i32, i32
  }
  func.func @transform_3(%arg0: i32) -> (i32, i32) {
    %c0_i32 = arith.constant 0 : i32
    %c0_i32_0 = arith.constant 0 : i32
    %c0_i32_1 = arith.constant 0 : i32
    return %c0_i32, %c0_i32_0 : i32, i32
  }
  func.func @transform_4(%arg0: i32) -> (i32, i32) {
    %c0_i32 = arith.constant 0 : i32
    %c0_i32_0 = arith.constant 0 : i32
    %c0_i32_1 = arith.constant 0 : i32
    return %c0_i32, %c0_i32_0 : i32, i32
  }
  func.func @transform_5(%arg0: i32) -> (i32, i32) {
    %c0_i32 = arith.constant 0 : i32
    %c0_i32_0 = arith.constant 0 : i32
    %c0_i32_1 = arith.constant 0 : i32
    return %c0_i32, %c0_i32_0 : i32, i32
  }
  func.func @transform_6(%arg0: i32) -> (i32, i32) {
    %c0_i32 = arith.constant 0 : i32
    %c0_i32_0 = arith.constant 0 : i32
    %c0_i32_1 = arith.constant 0 : i32
    return %c0_i32, %c0_i32_0 : i32, i32
  }
  func.func @transform_7(%arg0: i32) -> (i32, i32) {
    %c0_i32 = arith.constant 0 : i32
    %c0_i32_0 = arith.constant 0 : i32
    return %arg0, %c0_i32 : i32, i32
  }
}

</mosaic_0001>

<llo_original>
// kernel: net_forward.1
$region0: #{net_forward.1}
  #allocation0 [shape = 'u32[]', space=smem, size = 0x4, offset = 0x4, fixed_abs, tag = 'smem constant byte address 0x4 - core index']
  #allocation1 [shape = 'u32[144,128]{1,0:T(1,128)}', space=vmem, size = 0x12000, scoped, tag = 'internal scratch']
  %s0 = inlined_call_operand.vmem [shape: bf16[8,256], index: 0, kind: input, shape index: {}]
  %s1 = inlined_call_operand.vmem [shape: bf16[256,128], index: 1, kind: input, shape index: {}]
  %s2 = inlined_call_operand.vmem [shape: f32[1,128], index: 2, kind: input, shape index: {}]
  %s3 = inlined_call_operand.vmem [shape: bf16[128,128], index: 3, kind: input, shape index: {}]
  %s4 = inlined_call_operand.vmem [shape: f32[1,128], index: 4, kind: input, shape index: {}]
  %s5 = inlined_call_operand.vmem [shape: bf16[128,128], index: 5, kind: input, shape index: {}]
  %s6 = inlined_call_operand.vmem [shape: f32[1,128], index: 6, kind: input, shape index: {}]
  %s7 = inlined_call_operand.vmem [shape: bf16[8,128], index: 7, kind: output, shape index: {}]
  %s8 = sld [smem:[#allocation0]]
  $region38: #{net_forward.1} parent=0
    _
  %s10 = ssub.s32 1, %s8
  %s11 = scalar_select 0, %s10, %s8
  // Predicated region
  $region2: #{net_forward.1} parent=0 // pred_check
    _
  $region3: #{net_forward.1} parent=0 // pred_check_branch
    %13 = sbr.rel (0) target = $region5
  $region4: #{net_forward.1} parent=0 // pred_region
    _
  $region5: #{net_forward.1} parent=0 // pred_fallthru
    _
  // Predicated region
  $region6: #{net_forward.1} parent=0 // pred_check
    _
  $region7: #{net_forward.1} parent=0 // pred_check_branch
    %15 = sbr.rel (0) target = $region9
  $region8: #{net_forward.1} parent=0 // pred_region
    _
  $region9: #{net_forward.1} parent=0 // pred_fallthru
    _
  // Predicated region
  $region10: #{net_forward.1} parent=0 // pred_check
    _
  $region11: #{net_forward.1} parent=0 // pred_check_branch
    %17 = sbr.rel (0) target = $region13
  $region12: #{net_forward.1} parent=0 // pred_region
    _
  $region13: #{net_forward.1} parent=0 // pred_fallthru
    _
  // Predicated region
  $region14: #{net_forward.1} parent=0 // pred_check
    _
  $region15: #{net_forward.1} parent=0 // pred_check_branch
    %19 = sbr.rel (0) target = $region17
  $region16: #{net_forward.1} parent=0 // pred_region
    _
  $region17: #{net_forward.1} parent=0 // pred_fallthru
    _
  // Predicated region
  $region18: #{net_forward.1} parent=0 // pred_check
    _
  $region19: #{net_forward.1} parent=0 // pred_check_branch
    %21 = sbr.rel (0) target = $region21
  $region20: #{net_forward.1} parent=0 // pred_region
    _
  $region21: #{net_forward.1} parent=0 // pred_fallthru
    _
  // Predicated region
  $region22: #{net_forward.1} parent=0 // pred_check
    _
  $region23: #{net_forward.1} parent=0 // pred_check_branch
    %23 = sbr.rel (0) target = $region25
  $region24: #{net_forward.1} parent=0 // pred_region
    _
  $region25: #{net_forward.1} parent=0 // pred_fallthru
    _
  // Predicated region
  $region26: #{net_forward.1} parent=0 // pred_check
    _
  $region27: #{net_forward.1} parent=0 // pred_check_branch
    %25 = sbr.rel (0) target = $region29
  $region28: #{net_forward.1} parent=0 // pred_region
    _
  $region29: #{net_forward.1} parent=0 // pred_fallthru
    _
  %v27 = vld [vmem:[%s0] sm:$0xff]
  %v28 = vld [vmem:[%s1] sm:$0xf]
  %v29 = vld [vmem:[%s1 + $0x4] sm:$0xf]
  %v30 = vld [vmem:[%s1 + $0x8] sm:$0xf]
  %v31 = vld [vmem:[%s1 + $0xc] sm:$0xf]
  %v32 = vld [vmem:[%s1 + $0x10] sm:$0xf]
  %v33 = vld [vmem:[%s1 + $0x14] sm:$0xf]
  %v34 = vld [vmem:[%s1 + $0x18] sm:$0xf]
  %v35 = vld [vmem:[%s1 + $0x1c] sm:$0xf]
  %v36 = vld [vmem:[%s1 + $0x20] sm:$0xf]
  %v37 = vld [vmem:[%s1 + $0x24] sm:$0xf]
  %v38 = vld [vmem:[%s1 + $0x28] sm:$0xf]
  %v39 = vld [vmem:[%s1 + $0x2c] sm:$0xf]
  %v40 = vld [vmem:[%s1 + $0x30] sm:$0xf]
  %v41 = vld [vmem:[%s1 + $0x34] sm:$0xf]
  %v42 = vld [vmem:[%s1 + $0x38] sm:$0xf]
  %v43 = vld [vmem:[%s1 + $0x3c] sm:$0xf]
  %v44 = vld [vmem:[%s1 + $0x40] sm:$0xf]
  %v45 = vld [vmem:[%s1 + $0x44] sm:$0xf]
  %v46 = vld [vmem:[%s1 + $0x48] sm:$0xf]
  %v47 = vld [vmem:[%s1 + $0x4c] sm:$0xf]
  %v48 = vld [vmem:[%s1 + $0x50] sm:$0xf]
  %v49 = vld [vmem:[%s1 + $0x54] sm:$0xf]
  %v50 = vld [vmem:[%s1 + $0x58] sm:$0xf]
  %v51 = vld [vmem:[%s1 + $0x5c] sm:$0xf]
  %v52 = vld [vmem:[%s1 + $0x60] sm:$0xf]
  %v53 = vld [vmem:[%s1 + $0x64] sm:$0xf]
  %v54 = vld [vmem:[%s1 + $0x68] sm:$0xf]
  %v55 = vld [vmem:[%s1 + $0x6c] sm:$0xf]
  %v56 = vld [vmem:[%s1 + $0x70] sm:$0xf]
  %v57 = vld [vmem:[%s1 + $0x74] sm:$0xf]
  %v58 = vld [vmem:[%s1 + $0x78] sm:$0xf]
  %v59 = vld [vmem:[%s1 + $0x7c] sm:$0xf]
  %v60 = vld [vmem:[%s2] sm:$0x1]
  %v62 = vlaneseq
  %v63 = vshrl.u32 %v62, 7
  %v64 = vsub.s32 0, %v63
  %v65 = vrot.slane %v60, %v64
  %v68 = vunpack.c.l.b16 %v27
  %v69 = vunpack.c.h.b16 %v27
  %v70 = vpack.c.b16 %v68, %v68
  %v71 = vpack.c.b16 %v69, %v69
  %v106 = vunpack.c.l.b16 %v28
  %v107 = vunpack.c.l.b16 %v29
  %v108 = vunpack.c.l.b16 %v30
  %v109 = vunpack.c.l.b16 %v31
  %v110 = vunpack.c.l.b16 %v32
  %v111 = vunpack.c.l.b16 %v33
  %v112 = vunpack.c.l.b16 %v34
  %v113 = vunpack.c.l.b16 %v35
  %v114 = vunpack.c.l.b16 %v36
  %v115 = vunpack.c.l.b16 %v37
  %v116 = vunpack.c.l.b16 %v38
  %v117 = vunpack.c.l.b16 %v39
  %v118 = vunpack.c.l.b16 %v40
  %v119 = vunpack.c.l.b16 %v41
  %v120 = vunpack.c.l.b16 %v42
  %v121 = vunpack.c.l.b16 %v43
  %v122 = vunpack.c.l.b16 %v44
  %v123 = vunpack.c.l.b16 %v45
  %v124 = vunpack.c.l.b16 %v46
  %v125 = vunpack.c.l.b16 %v47
  %v126 = vunpack.c.l.b16 %v48
  %v127 = vunpack.c.l.b16 %v49
  %v128 = vunpack.c.l.b16 %v50
  %v129 = vunpack.c.l.b16 %v51
  %v130 = vunpack.c.l.b16 %v52
  %v131 = vunpack.c.l.b16 %v53
  %v132 = vunpack.c.l.b16 %v54
  %v133 = vunpack.c.l.b16 %v55
  %v134 = vunpack.c.l.b16 %v56
  %v135 = vunpack.c.l.b16 %v57
  %v136 = vunpack.c.l.b16 %v58
  %v137 = vunpack.c.l.b16 %v59
  %v138 = vpack.c.b16 %v107, %v106
  %v139 = vpack.c.b16 %v109, %v108
  %v140 = vpack.c.b16 %v111, %v110
  %v141 = vpack.c.b16 %v113, %v112
  %v142 = vpack.c.b16 %v115, %v114
  %v143 = vpack.c.b16 %v117, %v116
  %v144 = vpack.c.b16 %v119, %v118
  %v145 = vpack.c.b16 %v121, %v120
  %v146 = vpack.c.b16 %v123, %v122
  %v147 = vpack.c.b16 %v125, %v124
  %v148 = vpack.c.b16 %v127, %v126
  %v149 = vpack.c.b16 %v129, %v128
  %v150 = vpack.c.b16 %v131, %v130
  %v151 = vpack.c.b16 %v133, %v132
  %v152 = vpack.c.b16 %v135, %v134
  %v153 = vpack.c.b16 %v137, %v136
  %170 = vmatprep.subr.bf16.mxu0 0
  %171 = vmatpush1.bf16.msra.mxu0 %v145
  %172 = vmatprep.subr.bf16.mxu0 0
  %173 = vmatpush1.bf16.msra.mxu0 %v144
  %174 = vmatprep.subr.bf16.mxu0 0
  %175 = vmatpush1.bf16.msra.mxu0 %v143
  %176 = vmatprep.subr.bf16.mxu0 0
  %177 = vmatpush1.bf16.msra.mxu0 %v142
  %178 = vmatprep.subr.bf16.mxu0 0
  %179 = vmatpush1.bf16.msra.mxu0 %v141
  %180 = vmatprep.subr.bf16.mxu0 0
  %181 = vmatpush1.bf16.msra.mxu0 %v140
  %182 = vmatprep.subr.bf16.mxu0 0
  %183 = vmatpush1.bf16.msra.mxu0 %v139
  %184 = vmatprep.subr.bf16.mxu0 0
  %185 = vmatpush1.bf16.msra.mxu0 %v138
  %186 = vmatprep.subr.bf16.mxu0 0
  %187 = vmatpush2.bf16.msra.mxu0 %v153
  %188 = vmatprep.subr.bf16.mxu0 0
  %189 = vmatpush2.bf16.msra.mxu0 %v152
  %190 = vmatprep.subr.bf16.mxu0 0
  %191 = vmatpush2.bf16.msra.mxu0 %v151
  %192 = vmatprep.subr.bf16.mxu0 0
  %193 = vmatpush2.bf16.msra.mxu0 %v150
  %194 = vmatprep.subr.bf16.mxu0 0
  %195 = vmatpush2.bf16.msra.mxu0 %v149
  %196 = vmatprep.subr.bf16.mxu0 0
  %197 = vmatpush2.bf16.msra.mxu0 %v148
  %198 = vmatprep.subr.bf16.mxu0 0
  %199 = vmatpush2.bf16.msra.mxu0 %v147
  %200 = vmatprep.subr.bf16.mxu0 0
  %201 = vmatpush2.bf16.msra.mxu0 %v146
  %202 = vmatprep.mubr.bf16.mxu0 %v71
  %203 = vmatmul.mubr.bf16.gmra.mxu0 %v70
  %v204 = vpop.f32.mrf.mxu0
  %v205 = vadd.f32 %v65, %v204
  %v206 = vpop.f32.mrf.mxu0
  %v207 = vpop.f32.mrf.mxu0
  %v208 = vpop.f32.mrf.mxu0
  %209 = vdwg.mxu0
  %v210 = vmax.f32 %v205, 0.0
  %v211 = vld [vmem:[%s3] sm:$0xf]
  %v212 = vld [vmem:[%s3 + $0x4] sm:$0xf]
  %v213 = vld [vmem:[%s3 + $0x8] sm:$0xf]
  %v214 = vld [vmem:[%s3 + $0xc] sm:$0xf]
  %v215 = vld [vmem:[%s3 + $0x10] sm:$0xf]
  %v216 = vld [vmem:[%s3 + $0x14] sm:$0xf]
  %v217 = vld [vmem:[%s3 + $0x18] sm:$0xf]
  %v218 = vld [vmem:[%s3 + $0x1c] sm:$0xf]
  %v219 = vld [vmem:[%s3 + $0x20] sm:$0xf]
  %v220 = vld [vmem:[%s3 + $0x24] sm:$0xf]
  %v221 = vld [vmem:[%s3 + $0x28] sm:$0xf]
  %v222 = vld [vmem:[%s3 + $0x2c] sm:$0xf]
  %v223 = vld [vmem:[%s3 + $0x30] sm:$0xf]
  %v224 = vld [vmem:[%s3 + $0x34] sm:$0xf]
  %v225 = vld [vmem:[%s3 + $0x38] sm:$0xf]
  %v226 = vld [vmem:[%s3 + $0x3c] sm:$0xf]
  %v227 = vld [vmem:[%s4] sm:$0x1]
  %v228 = vpack.c.bf16 %v210, %v210
  %v230 = vlaneseq
  %v231 = vshrl.u32 %v230, 7
  %v232 = vsub.s32 0, %v231
  %v233 = vrot.slane %v227, %v232
  %v251 = vunpack.c.l.b16 %v211
  %v252 = vunpack.c.l.b16 %v212
  %v253 = vunpack.c.l.b16 %v213
  %v254 = vunpack.c.l.b16 %v214
  %v255 = vunpack.c.l.b16 %v215
  %v256 = vunpack.c.l.b16 %v216
  %v257 = vunpack.c.l.b16 %v217
  %v258 = vunpack.c.l.b16 %v218
  %v259 = vunpack.c.l.b16 %v219
  %v260 = vunpack.c.l.b16 %v220
  %v261 = vunpack.c.l.b16 %v221
  %v262 = vunpack.c.l.b16 %v222
  %v263 = vunpack.c.l.b16 %v223
  %v264 = vunpack.c.l.b16 %v224
  %v265 = vunpack.c.l.b16 %v225
  %v266 = vunpack.c.l.b16 %v226
  %v267 = vpack.c.b16 %v252, %v251
  %v268 = vpack.c.b16 %v254, %v253
  %v269 = vpack.c.b16 %v256, %v255
  %v270 = vpack.c.b16 %v258, %v257
  %v271 = vpack.c.b16 %v260, %v259
  %v272 = vpack.c.b16 %v262, %v261
  %v273 = vpack.c.b16 %v264, %v263
  %v274 = vpack.c.b16 %v266, %v265
  %283 = vmatprep.subr.bf16.mxu0 0
  %284 = vmatpush1.bf16.msra.mxu0 %v274
  %285 = vmatprep.subr.bf16.mxu0 0
  %286 = vmatpush1.bf16.msra.mxu0 %v273
  %287 = vmatprep.subr.bf16.mxu0 0
  %288 = vmatpush1.bf16.msra.mxu0 %v272
  %289 = vmatprep.subr.bf16.mxu0 0
  %290 = vmatpush1.bf16.msra.mxu0 %v271
  %291 = vmatprep.subr.bf16.mxu0 0
  %292 = vmatpush1.bf16.msra.mxu0 %v270
  %293 = vmatprep.subr.bf16.mxu0 0
  %294 = vmatpush1.bf16.msra.mxu0 %v269
  %295 = vmatprep.subr.bf16.mxu0 0
  %296 = vmatpush1.bf16.msra.mxu0 %v268
  %297 = vmatprep.subr.bf16.mxu0 0
  %298 = vmatpush1.bf16.msra.mxu0 %v267
  %299 = vmatprep.subr.bf16.mxu0 0
  %300 = vmatpush2.bf16.msra.mxu0 0
  %301 = vmatprep.subr.bf16.mxu0 0
  %302 = vmatpush2.bf16.msra.mxu0 0
  %303 = vmatprep.subr.bf16.mxu0 0
  %304 = vmatpush2.bf16.msra.mxu0 0
  %305 = vmatprep.subr.bf16.mxu0 0
  %306 = vmatpush2.bf16.msra.mxu0 0
  %307 = vmatprep.subr.bf16.mxu0 0
  %308 = vmatpush2.bf16.msra.mxu0 0
  %309 = vmatprep.subr.bf16.mxu0 0
  %310 = vmatpush2.bf16.msra.mxu0 0
  %311 = vmatprep.subr.bf16.mxu0 0
  %312 = vmatpush2.bf16.msra.mxu0 0
  %313 = vmatprep.subr.bf16.mxu0 0
  %314 = vmatpush2.bf16.msra.mxu0 0
  %315 = vmatprep.mubr.bf16.mxu0 0
  %316 = vmatmul.mubr.bf16.gmra.mxu0 %v228
  %v317 = vpop.f32.mrf.mxu0
  %v318 = vadd.f32 %v233, %v317
  %v319 = vpop.f32.mrf.mxu0
  %v320 = vpop.f32.mrf.mxu0
  %v321 = vpop.f32.mrf.mxu0
  %322 = vdwg.mxu0
  %v323 = vmax.f32 %v318, 0.0
  %v324 = vld [vmem:[%s5] sm:$0xf]
  %v325 = vld [vmem:[%s5 + $0x4] sm:$0xf]
  %v326 = vld [vmem:[%s5 + $0x8] sm:$0xf]
  %v327 = vld [vmem:[%s5 + $0xc] sm:$0xf]
  %v328 = vld [vmem:[%s5 + $0x10] sm:$0xf]
  %v329 = vld [vmem:[%s5 + $0x14] sm:$0xf]
  %v330 = vld [vmem:[%s5 + $0x18] sm:$0xf]
  %v331 = vld [vmem:[%s5 + $0x1c] sm:$0xf]
  %v332 = vld [vmem:[%s5 + $0x20] sm:$0xf]
  %v333 = vld [vmem:[%s5 + $0x24] sm:$0xf]
  %v334 = vld [vmem:[%s5 + $0x28] sm:$0xf]
  %v335 = vld [vmem:[%s5 + $0x2c] sm:$0xf]
  %v336 = vld [vmem:[%s5 + $0x30] sm:$0xf]
  %v337 = vld [vmem:[%s5 + $0x34] sm:$0xf]
  %v338 = vld [vmem:[%s5 + $0x38] sm:$0xf]
  %v339 = vld [vmem:[%s5 + $0x3c] sm:$0xf]
  %v340 = vld [vmem:[%s6] sm:$0x1]
  %v341 = vpack.c.bf16 %v323, %v323
  %v343 = vlaneseq
  %v344 = vshrl.u32 %v343, 7
  %v345 = vsub.s32 0, %v344
  %v346 = vrot.slane %v340, %v345
  %v364 = vunpack.c.l.b16 %v324
  %v365 = vunpack.c.l.b16 %v325
  %v366 = vunpack.c.l.b16 %v326
  %v367 = vunpack.c.l.b16 %v327
  %v368 = vunpack.c.l.b16 %v328
  %v369 = vunpack.c.l.b16 %v329
  %v370 = vunpack.c.l.b16 %v330
  %v371 = vunpack.c.l.b16 %v331
  %v372 = vunpack.c.l.b16 %v332
  %v373 = vunpack.c.l.b16 %v333
  %v374 = vunpack.c.l.b16 %v334
  %v375 = vunpack.c.l.b16 %v335
  %v376 = vunpack.c.l.b16 %v336
  %v377 = vunpack.c.l.b16 %v337
  %v378 = vunpack.c.l.b16 %v338
  %v379 = vunpack.c.l.b16 %v339
  %v380 = vpack.c.b16 %v365, %v364
  %v381 = vpack.c.b16 %v367, %v366
  %v382 = vpack.c.b16 %v369, %v368
  %v383 = vpack.c.b16 %v371, %v370
  %v384 = vpack.c.b16 %v373, %v372
  %v385 = vpack.c.b16 %v375, %v374
  %v386 = vpack.c.b16 %v377, %v376
  %v387 = vpack.c.b16 %v379, %v378
  %396 = vmatprep.subr.bf16.mxu0 0
  %397 = vmatpush1.bf16.msra.mxu0 %v387
  %398 = vmatprep.subr.bf16.mxu0 0
  %399 = vmatpush1.bf16.msra.mxu0 %v386
  %400 = vmatprep.subr.bf16.mxu0 0
  %401 = vmatpush1.bf16.msra.mxu0 %v385
  %402 = vmatprep.subr.bf16.mxu0 0
  %403 = vmatpush1.bf16.msra.mxu0 %v384
  %404 = vmatprep.subr.bf16.mxu0 0
  %405 = vmatpush1.bf16.msra.mxu0 %v383
  %406 = vmatprep.subr.bf16.mxu0 0
  %407 = vmatpush1.bf16.msra.mxu0 %v382
  %408 = vmatprep.subr.bf16.mxu0 0
  %409 = vmatpush1.bf16.msra.mxu0 %v381
  %410 = vmatprep.subr.bf16.mxu0 0
  %411 = vmatpush1.bf16.msra.mxu0 %v380
  %412 = vmatprep.subr.bf16.mxu0 0
  %413 = vmatpush2.bf16.msra.mxu0 0
  %414 = vmatprep.subr.bf16.mxu0 0
  %415 = vmatpush2.bf16.msra.mxu0 0
  %416 = vmatprep.subr.bf16.mxu0 0
  %417 = vmatpush2.bf16.msra.mxu0 0
  %418 = vmatprep.subr.bf16.mxu0 0
  %419 = vmatpush2.bf16.msra.mxu0 0
  %420 = vmatprep.subr.bf16.mxu0 0
  %421 = vmatpush2.bf16.msra.mxu0 0
  %422 = vmatprep.subr.bf16.mxu0 0
  %423 = vmatpush2.bf16.msra.mxu0 0
  %424 = vmatprep.subr.bf16.mxu0 0
  %425 = vmatpush2.bf16.msra.mxu0 0
  %426 = vmatprep.subr.bf16.mxu0 0
  %427 = vmatpush2.bf16.msra.mxu0 0
  %428 = vmatprep.mubr.bf16.mxu0 0
  %429 = vmatmul.mubr.bf16.gmra.mxu0 %v341
  %v430 = vpop.f32.mrf.mxu0
  %v431 = vadd.f32 %v346, %v430
  %v432 = vpop.f32.mrf.mxu0
  %v433 = vpop.f32.mrf.mxu0
  %v434 = vpop.f32.mrf.mxu0
  %435 = vdwg.mxu0
  %v436 = vpack.c.bf16 %v431, %v431
  %437 = vst [vmem:[%s7] sm:$0xf] %v436
  // Predicated region
  $region30: #{net_forward.1} parent=0 // pred_check
    _
  $region31: #{net_forward.1} parent=0 // pred_check_branch
    %439 = sbr.rel (0) target = $region33
  $region32: #{net_forward.1} parent=0 // pred_region
    _
  $region33: #{net_forward.1} parent=0 // pred_fallthru
    _
  // Predicated region
  $region34: #{net_forward.1} parent=0 // pred_check
    _
  $region35: #{net_forward.1} parent=0 // pred_check_branch
    %441 = sbr.rel (0) target = $region37
  $region36: #{net_forward.1} parent=0 // pred_region
    _
  $region37: #{net_forward.1} parent=0 // pred_fallthru
    _

// kernel: net_forward.1
$region0: #{net_forward.1}
  #allocation0 [shape = 'u32[]', space=smem, size = 0x4, offset = 0x4, fixed_abs, tag = 'smem constant byte address 0x4 - core index']
  #allocation1 [shape = 'u32[144,128]{1,0:T(1,128)}', space=vmem, size = 0x12000, scoped, tag = 'internal scratch']
  %s0 = inlined_call_operand.vmem [shape: bf16[8,256], index: 0, kind: input, shape index: {}]
  %s1 = inlined_call_operand.vmem [shape: bf16[256,128], index: 1, kind: input, shape index: {}]
  %s2 = inlined_call_operand.vmem [shape: f32[1,128], index: 2, kind: input, shape index: {}]
  %s3 = inlined_call_operand.vmem [shape: bf16[128,128], index: 3, kind: input, shape index: {}]
  %s4 = inlined_call_operand.vmem [shape: f32[1,128], index: 4, kind: input, shape index: {}]
  %s5 = inlined_call_operand.vmem [shape: bf16[128,128], index: 5, kind: input, shape index: {}]
  %s6 = inlined_call_operand.vmem [shape: f32[1,128], index: 6, kind: input, shape index: {}]
  %s7 = inlined_call_operand.vmem [shape: bf16[8,128], index: 7, kind: output, shape index: {}]
  %s8 = sld [smem:[#allocation0]]
  $region38: #{net_forward.1} parent=0
    _
  %s10 = ssub.s32 1, %s8
  %s11 = scalar_select 0, %s10, %s8
  // Predicated region
  $region2: #{net_forward.1} parent=0 // pred_check
    _
  $region3: #{net_forward.1} parent=0 // pred_check_branch
    %13 = sbr.rel (0) target = $region5
  $region4: #{net_forward.1} parent=0 // pred_region
    _
  $region5: #{net_forward.1} parent=0 // pred_fallthru
    _
  // Predicated region
  $region6: #{net_forward.1} parent=0 // pred_check
    _
  $region7: #{net_forward.1} parent=0 // pred_check_branch
    %15 = sbr.rel (0) target = $region9
  $region8: #{net_forward.1} parent=0 // pred_region
    _
  $region9: #{net_forward.1} parent=0 // pred_fallthru
    _
  // Predicated region
  $region10: #{net_forward.1} parent=0 // pred_check
    _
  $region11: #{net_forward.1} parent=0 // pred_check_branch
    %17 = sbr.rel (0) target = $region13
  $region12: #{net_forward.1} parent=0 // pred_region
    _
  $region13: #{net_forward.1} parent=0 // pred_fallthru
    _
  // Predicated region
  $region14: #{net_forward.1} parent=0 // pred_check
    _
  $region15: #{net_forward.1} parent=0 // pred_check_branch
    %19 = sbr.rel (0) target = $region17
  $region16: #{net_forward.1} parent=0 // pred_region
    _
  $region17: #{net_forward.1} parent=0 // pred_fallthru
    _
  // Predicated region
  $region18: #{net_forward.1} parent=0 // pred_check
    _
  $region19: #{net_forward.1} parent=0 // pred_check_branch
    %21 = sbr.rel (0) target = $region21
  $region20: #{net_forward.1} parent=0 // pred_region
    _
  $region21: #{net_forward.1} parent=0 // pred_fallthru
    _
  // Predicated region
  $region22: #{net_forward.1} parent=0 // pred_check
    _
  $region23: #{net_forward.1} parent=0 // pred_check_branch
    %23 = sbr.rel (0) target = $region25
  $region24: #{net_forward.1} parent=0 // pred_region
    _
  $region25: #{net_forward.1} parent=0 // pred_fallthru
    _
  // Predicated region
  $region26: #{net_forward.1} parent=0 // pred_check
    _
  $region27: #{net_forward.1} parent=0 // pred_check_branch
    %25 = sbr.rel (0) target = $region29
  $region28: #{net_forward.1} parent=0 // pred_region
    _
  $region29: #{net_forward.1} parent=0 // pred_fallthru
    _
  %v27 = vld [vmem:[%s0] sm:$0xff]
  %v28 = vld [vmem:[%s1] sm:$0xf]
  %v29 = vld [vmem:[%s1 + $0x4] sm:$0xf]
  %v30 = vld [vmem:[%s1 + $0x8] sm:$0xf]
  %v31 = vld [vmem:[%s1 + $0xc] sm:$0xf]
  %v32 = vld [vmem:[%s1 + $0x10] sm:$0xf]
  %v33 = vld [vmem:[%s1 + $0x14] sm:$0xf]
  %v34 = vld [vmem:[%s1 + $0x18] sm:$0xf]
  %v35 = vld [vmem:[%s1 + $0x1c] sm:$0xf]
  %v36 = vld [vmem:[%s1 + $0x20] sm:$0xf]
  %v37 = vld [vmem:[%s1 + $0x24] sm:$0xf]
  %v38 = vld [vmem:[%s1 + $0x28] sm:$0xf]
  %v39 = vld [vmem:[%s1 + $0x2c] sm:$0xf]
  %v40 = vld [vmem:[%s1 + $0x30] sm:$0xf]
  %v41 = vld [vmem:[%s1 + $0x34] sm:$0xf]
  %v42 = vld [vmem:[%s1 + $0x38] sm:$0xf]
  %v43 = vld [vmem:[%s1 + $0x3c] sm:$0xf]
  %v44 = vld [vmem:[%s1 + $0x40] sm:$0xf]
  %v45 = vld [vmem:[%s1 + $0x44] sm:$0xf]
  %v46 = vld [vmem:[%s1 + $0x48] sm:$0xf]
  %v47 = vld [vmem:[%s1 + $0x4c] sm:$0xf]
  %v48 = vld [vmem:[%s1 + $0x50] sm:$0xf]
  %v49 = vld [vmem:[%s1 + $0x54] sm:$0xf]
  %v50 = vld [vmem:[%s1 + $0x58] sm:$0xf]
  %v51 = vld [vmem:[%s1 + $0x5c] sm:$0xf]
  %v52 = vld [vmem:[%s1 + $0x60] sm:$0xf]
  %v53 = vld [vmem:[%s1 + $0x64] sm:$0xf]
  %v54 = vld [vmem:[%s1 + $0x68] sm:$0xf]
  %v55 = vld [vmem:[%s1 + $0x6c] sm:$0xf]
  %v56 = vld [vmem:[%s1 + $0x70] sm:$0xf]
  %v57 = vld [vmem:[%s1 + $0x74] sm:$0xf]
  %v58 = vld [vmem:[%s1 + $0x78] sm:$0xf]
  %v59 = vld [vmem:[%s1 + $0x7c] sm:$0xf]
  %v60 = vld [vmem:[%s2] sm:$0x1]
  %v62 = vlaneseq
  %v63 = vshrl.u32 %v62, 7
  %v64 = vsub.s32 0, %v63
  %v65 = vrot.slane %v60, %v64
  %v68 = vunpack.c.l.b16 %v27
  %v69 = vunpack.c.h.b16 %v27
  %v70 = vpack.c.b16 %v68, %v68
  %v71 = vpack.c.b16 %v69, %v69
  %v106 = vunpack.c.l.b16 %v28
  %v107 = vunpack.c.l.b16 %v29
  %v108 = vunpack.c.l.b16 %v30
  %v109 = vunpack.c.l.b16 %v31
  %v110 = vunpack.c.l.b16 %v32
  %v111 = vunpack.c.l.b16 %v33
  %v112 = vunpack.c.l.b16 %v34
  %v113 = vunpack.c.l.b16 %v35
  %v114 = vunpack.c.l.b16 %v36
  %v115 = vunpack.c.l.b16 %v37
  %v116 = vunpack.c.l.b16 %v38
  %v117 = vunpack.c.l.b16 %v39
  %v118 = vunpack.c.l.b16 %v40
  %v119 = vunpack.c.l.b16 %v41
  %v120 = vunpack.c.l.b16 %v42
  %v121 = vunpack.c.l.b16 %v43
  %v122 = vunpack.c.l.b16 %v44
  %v123 = vunpack.c.l.b16 %v45
  %v124 = vunpack.c.l.b16 %v46
  %v125 = vunpack.c.l.b16 %v47
  %v126 = vunpack.c.l.b16 %v48
  %v127 = vunpack.c.l.b16 %v49
  %v128 = vunpack.c.l.b16 %v50
  %v129 = vunpack.c.l.b16 %v51
  %v130 = vunpack.c.l.b16 %v52
  %v131 = vunpack.c.l.b16 %v53
  %v132 = vunpack.c.l.b16 %v54
  %v133 = vunpack.c.l.b16 %v55
  %v134 = vunpack.c.l.b16 %v56
  %v135 = vunpack.c.l.b16 %v57
  %v136 = vunpack.c.l.b16 %v58
  %v137 = vunpack.c.l.b16 %v59
  %v138 = vpack.c.b16 %v107, %v106
  %v139 = vpack.c.b16 %v109, %v108
  %v140 = vpack.c.b16 %v111, %v110
  %v141 = vpack.c.b16 %v113, %v112
  %v142 = vpack.c.b16 %v115, %v114
  %v143 = vpack.c.b16 %v117, %v116
  %v144 = vpack.c.b16 %v119, %v118
  %v145 = vpack.c.b16 %v121, %v120
  %v146 = vpack.c.b16 %v123, %v122
  %v147 = vpack.c.b16 %v125, %v124
  %v148 = vpack.c.b16 %v127, %v126
  %v149 = vpack.c.b16 %v129, %v128
  %v150 = vpack.c.b16 %v131, %v130
  %v151 = vpack.c.b16 %v133, %v132
  %v152 = vpack.c.b16 %v135, %v134
  %v153 = vpack.c.b16 %v137, %v136
  %170 = vmatprep.subr.bf16.mxu0 0
  %171 = vmatpush1.bf16.msra.mxu0 %v145
  %172 = vmatprep.subr.bf16.mxu0 0
  %173 = vmatpush1.bf16.msra.mxu0 %v144
  %174 = vmatprep.subr.bf16.mxu0 0
  %175 = vmatpush1.bf16.msra.mxu0 %v143
  %176 = vmatprep.subr.bf16.mxu0 0
  %177 = vmatpush1.bf16.msra.mxu0 %v142
  %178 = vmatprep.subr.bf16.mxu0 0
  %179 = vmatpush1.bf16.msra.mxu0 %v141
  %180 = vmatprep.subr.bf16.mxu0 0
  %181 = vmatpush1.bf16.msra.mxu0 %v140
  %182 = vmatprep.subr.bf16.mxu0 0
  %183 = vmatpush1.bf16.msra.mxu0 %v139
  %184 = vmatprep.subr.bf16.mxu0 0
  %185 = vmatpush1.bf16.msra.mxu0 %v138
  %186 = vmatprep.subr.bf16.mxu0 0
  %187 = vmatpush2.bf16.msra.mxu0 %v153
  %188 = vmatprep.subr.bf16.mxu0 0
  %189 = vmatpush2.bf16.msra.mxu0 %v152
  %190 = vmatprep.subr.bf16.mxu0 0
  %191 = vmatpush2.bf16.msra.mxu0 %v151
  %192 = vmatprep.subr.bf16.mxu0 0
  %193 = vmatpush2.bf16.msra.mxu0 %v150
  %194 = vmatprep.subr.bf16.mxu0 0
  %195 = vmatpush2.bf16.msra.mxu0 %v149
  %196 = vmatprep.subr.bf16.mxu0 0
  %197 = vmatpush2.bf16.msra.mxu0 %v148
  %198 = vmatprep.subr.bf16.mxu0 0
  %199 = vmatpush2.bf16.msra.mxu0 %v147
  %200 = vmatprep.subr.bf16.mxu0 0
  %201 = vmatpush2.bf16.msra.mxu0 %v146
  %202 = vmatprep.mubr.bf16.mxu0 %v71
  %203 = vmatmul.mubr.bf16.gmra.mxu0 %v70
  %v204 = vpop.f32.mrf.mxu0
  %v205 = vadd.f32 %v65, %v204
  %v206 = vpop.f32.mrf.mxu0
  %v207 = vpop.f32.mrf.mxu0
  %v208 = vpop.f32.mrf.mxu0
  %209 = vdwg.mxu0
  %v210 = vmax.f32 %v205, 0.0
  %v211 = vld [vmem:[%s3] sm:$0xf]
  %v212 = vld [vmem:[%s3 + $0x4] sm:$0xf]
  %v213 = vld [vmem:[%s3 + $0x8] sm:$0xf]
  %v214 = vld [vmem:[%s3 + $0xc] sm:$0xf]
  %v215 = vld [vmem:[%s3 + $0x10] sm:$0xf]
  %v216 = vld [vmem:[%s3 + $0x14] sm:$0xf]
  %v217 = vld [vmem:[%s3 + $0x18] sm:$0xf]
  %v218 = vld [vmem:[%s3 + $0x1c] sm:$0xf]
  %v219 = vld [vmem:[%s3 + $0x20] sm:$0xf]
  %v220 = vld [vmem:[%s3 + $0x24] sm:$0xf]
  %v221 = vld [vmem:[%s3 + $0x28] sm:$0xf]
  %v222 = vld [vmem:[%s3 + $0x2c] sm:$0xf]
  %v223 = vld [vmem:[%s3 + $0x30] sm:$0xf]
  %v224 = vld [vmem:[%s3 + $0x34] sm:$0xf]
  %v225 = vld [vmem:[%s3 + $0x38] sm:$0xf]
  %v226 = vld [vmem:[%s3 + $0x3c] sm:$0xf]
  %v227 = vld [vmem:[%s4] sm:$0x1]
  %v228 = vpack.c.bf16 %v210, %v210
  %v230 = vlaneseq
  %v231 = vshrl.u32 %v230, 7
  %v232 = vsub.s32 0, %v231
  %v233 = vrot.slane %v227, %v232
  %v251 = vunpack.c.l.b16 %v211
  %v252 = vunpack.c.l.b16 %v212
  %v253 = vunpack.c.l.b16 %v213
  %v254 = vunpack.c.l.b16 %v214
  %v255 = vunpack.c.l.b16 %v215
  %v256 = vunpack.c.l.b16 %v216
  %v257 = vunpack.c.l.b16 %v217
  %v258 = vunpack.c.l.b16 %v218
  %v259 = vunpack.c.l.b16 %v219
  %v260 = vunpack.c.l.b16 %v220
  %v261 = vunpack.c.l.b16 %v221
  %v262 = vunpack.c.l.b16 %v222
  %v263 = vunpack.c.l.b16 %v223
  %v264 = vunpack.c.l.b16 %v224
  %v265 = vunpack.c.l.b16 %v225
  %v266 = vunpack.c.l.b16 %v226
  %v267 = vpack.c.b16 %v252, %v251
  %v268 = vpack.c.b16 %v254, %v253
  %v269 = vpack.c.b16 %v256, %v255
  %v270 = vpack.c.b16 %v258, %v257
  %v271 = vpack.c.b16 %v260, %v259
  %v272 = vpack.c.b16 %v262, %v261
  %v273 = vpack.c.b16 %v264, %v263
  %v274 = vpack.c.b16 %v266, %v265
  %283 = vmatprep.subr.bf16.mxu0 0
  %284 = vmatpush1.bf16.msra.mxu0 %v274
  %285 = vmatprep.subr.bf16.mxu0 0
  %286 = vmatpush1.bf16.msra.mxu0 %v273
  %287 = vmatprep.subr.bf16.mxu0 0
  %288 = vmatpush1.bf16.msra.mxu0 %v272
  %289 = vmatprep.subr.bf16.mxu0 0
  %290 = vmatpush1.bf16.msra.mxu0 %v271
  %291 = vmatprep.subr.bf16.mxu0 0
  %292 = vmatpush1.bf16.msra.mxu0 %v270
  %293 = vmatprep.subr.bf16.mxu0 0
  %294 = vmatpush1.bf16.msra.mxu0 %v269
  %295 = vmatprep.subr.bf16.mxu0 0
  %296 = vmatpush1.bf16.msra.mxu0 %v268
  %297 = vmatprep.subr.bf16.mxu0 0
  %298 = vmatpush1.bf16.msra.mxu0 %v267
  %299 = vmatprep.subr.bf16.mxu0 0
  %300 = vmatpush2.bf16.msra.mxu0 0
  %301 = vmatprep.subr.bf16.mxu0 0
  %302 = vmatpush2.bf16.msra.mxu0 0
  %303 = vmatprep.subr.bf16.mxu0 0
  %304 = vmatpush2.bf16.msra.mxu0 0
  %305 = vmatprep.subr.bf16.mxu0 0
  %306 = vmatpush2.bf16.msra.mxu0 0
  %307 = vmatprep.subr.bf16.mxu0 0
  %308 = vmatpush2.bf16.msra.mxu0 0
  %309 = vmatprep.subr.bf16.mxu0 0
  %310 = vmatpush2.bf16.msra.mxu0 0
  %311 = vmatprep.subr.bf16.mxu0 0
  %312 = vmatpush2.bf16.msra.mxu0 0
  %313 = vmatprep.subr.bf16.mxu0 0
  %314 = vmatpush2.bf16.msra.mxu0 0
  %315 = vmatprep.mubr.bf16.mxu0 0
  %316 = vmatmul.mubr.bf16.gmra.mxu0 %v228
  %v317 = vpop.f32.mrf.mxu0
  %v318 = vadd.f32 %v233, %v317
  %v319 = vpop.f32.mrf.mxu0
  %v320 = vpop.f32.mrf.mxu0
  %v321 = vpop.f32.mrf.mxu0
  %322 = vdwg.mxu0
  %v323 = vmax.f32 %v318, 0.0
  %v324 = vld [vmem:[%s5] sm:$0xf]
  %v325 = vld [vmem:[%s5 + $0x4] sm:$0xf]
  %v326 = vld [vmem:[%s5 + $0x8] sm:$0xf]
  %v327 = vld [vmem:[%s5 + $0xc] sm:$0xf]
  %v328 = vld [vmem:[%s5 + $0x10] sm:$0xf]
  %v329 = vld [vmem:[%s5 + $0x14] sm:$0xf]
  %v330 = vld [vmem:[%s5 + $0x18] sm:$0xf]
  %v331 = vld [vmem:[%s5 + $0x1c] sm:$0xf]
  %v332 = vld [vmem:[%s5 + $0x20] sm:$0xf]
  %v333 = vld [vmem:[%s5 + $0x24] sm:$0xf]
  %v334 = vld [vmem:[%s5 + $0x28] sm:$0xf]
  %v335 = vld [vmem:[%s5 + $0x2c] sm:$0xf]
  %v336 = vld [vmem:[%s5 + $0x30] sm:$0xf]
  %v337 = vld [vmem:[%s5 + $0x34] sm:$0xf]
  %v338 = vld [vmem:[%s5 + $0x38] sm:$0xf]
  %v339 = vld [vmem:[%s5 + $0x3c] sm:$0xf]
  %v340 = vld [vmem:[%s6] sm:$0x1]
  %v341 = vpack.c.bf16 %v323, %v323
  %v343 = vlaneseq
  %v344 = vshrl.u32 %v343, 7
  %v345 = vsub.s32 0, %v344
  %v346 = vrot.slane %v340, %v345
  %v364 = vunpack.c.l.b16 %v324
  %v365 = vunpack.c.l.b16 %v325
  %v366 = vunpack.c.l.b16 %v326
  %v367 = vunpack.c.l.b16 %v327
  %v368 = vunpack.c.l.b16 %v328
  %v369 = vunpack.c.l.b16 %v329
  %v370 = vunpack.c.l.b16 %v330
  %v371 = vunpack.c.l.b16 %v331
  %v372 = vunpack.c.l.b16 %v332
  %v373 = vunpack.c.l.b16 %v333
  %v374 = vunpack.c.l.b16 %v334
  %v375 = vunpack.c.l.b16 %v335
  %v376 = vunpack.c.l.b16 %v336
  %v377 = vunpack.c.l.b16 %v337
  %v378 = vunpack.c.l.b16 %v338
  %v379 = vunpack.c.l.b16 %v339
  %v380 = vpack.c.b16 %v365, %v364
  %v381 = vpack.c.b16 %v367, %v366
  %v382 = vpack.c.b16 %v369, %v368
  %v383 = vpack.c.b16 %v371, %v370
  %v384 = vpack.c.b16 %v373, %v372
  %v385 = vpack.c.b16 %v375, %v374
  %v386 = vpack.c.b16 %v377, %v376
  %v387 = vpack.c.b16 %v379, %v378
  %396 = vmatprep.subr.bf16.mxu0 0
  %397 = vmatpush1.bf16.msra.mxu0 %v387
  %398 = vmatprep.subr.bf16.mxu0 0
  %399 = vmatpush1.bf16.msra.mxu0 %v386
  %400 = vmatprep.subr.bf16.mxu0 0
  %401 = vmatpush1.bf16.msra.mxu0 %v385
  %402 = vmatprep.subr.bf16.mxu0 0
  %403 = vmatpush1.bf16.msra.mxu0 %v384
  %404 = vmatprep.subr.bf16.mxu0 0
  %405 = vmatpush1.bf16.msra.mxu0 %v383
  %406 = vmatprep.subr.bf16.mxu0 0
  %407 = vmatpush1.bf16.msra.mxu0 %v382
  %408 = vmatprep.subr.bf16.mxu0 0
  %409 = vmatpush1.bf16.msra.mxu0 %v381
  %410 = vmatprep.subr.bf16.mxu0 0
  %411 = vmatpush1.bf16.msra.mxu0 %v380
  %412 = vmatprep.subr.bf16.mxu0 0
  %413 = vmatpush2.bf16.msra.mxu0 0
  %414 = vmatprep.subr.bf16.mxu0 0
  %415 = vmatpush2.bf16.msra.mxu0 0
  %416 = vmatprep.subr.bf16.mxu0 0
  %417 = vmatpush2.bf16.msra.mxu0 0
  %418 = vmatprep.subr.bf16.mxu0 0
  %419 = vmatpush2.bf16.msra.mxu0 0
  %420 = vmatprep.subr.bf16.mxu0 0
  %421 = vmatpush2.bf16.msra.mxu0 0
  %422 = vmatprep.subr.bf16.mxu0 0
  %423 = vmatpush2.bf16.msra.mxu0 0
  %424 = vmatprep.subr.bf16.mxu0 0
  %425 = vmatpush2.bf16.msra.mxu0 0
  %426 = vmatprep.subr.bf16.mxu0 0
  %427 = vmatpush2.bf16.msra.mxu0 0
  %428 = vmatprep.mubr.bf16.mxu0 0
  %429 = vmatmul.mubr.bf16.gmra.mxu0 %v341
  %v430 = vpop.f32.mrf.mxu0
  %v431 = vadd.f32 %v346, %v430
  %v432 = vpop.f32.mrf.mxu0
  %v433 = vpop.f32.mrf.mxu0
  %v434 = vpop.f32.mrf.mxu0
  %435 = vdwg.mxu0
  %v436 = vpack.c.bf16 %v431, %v431
  %437 = vst [vmem:[%s7] sm:$0xf] %v436
  // Predicated region
  $region30: #{net_forward.1} parent=0 // pred_check
    _
  $region31: #{net_forward.1} parent=0 // pred_check_branch
    %439 = sbr.rel (0) target = $region33
  $region32: #{net_forward.1} parent=0 // pred_region
    _
  $region33: #{net_forward.1} parent=0 // pred_fallthru
    _
  // Predicated region
  $region34: #{net_forward.1} parent=0 // pred_check
    _
  $region35: #{net_forward.1} parent=0 // pred_check_branch
    %441 = sbr.rel (0) target = $region37
  $region36: #{net_forward.1} parent=0 // pred_region
    _
  $region37: #{net_forward.1} parent=0 // pred_fallthru
    _

</llo_original>
